<compile_context>
chip_gen: v7x
topology: tpu7x:2x2x1
jax: 0.10.0
libtpu: 0.0.40
codegen_flags: <defaults>
</compile_context>

<pallas_src>
import functools

import jax
import jax.numpy as jnp
from jax.experimental import pallas as pl


LANE = 128  # TPU lane width: pad the output feature dim to a multiple of this.


def _round_up(x, m):
    return ((x + m - 1) // m) * m


# ------------------------------ Pallas kernel ------------------------------ #
def bertseq_head_kernel(x_ref, w_ref, b_ref, o_ref):
    """out = pooled @ W_fold + b_fold   (single MXU matmul, f32 accumulation).

    W_fold / b_fold are the pre-folded classifier+fc1+fc2+fc3 weights/bias,
    lane-padded to 128 columns.  Operands are cast to bf16 for the MXU; the
    bias is added in f32 after the dot.
    """
    x = x_ref[...].astype(jnp.bfloat16)
    acc = jnp.dot(x, w_ref[...], preferred_element_type=jnp.float32)
    o_ref[...] = acc + b_ref[...]


def bertseq_head(pooled, w_fold, b_fold):
    """pooled: [B, H] f32, w_fold: [H, Np] bf16, b_fold: [1, Np] f32 -> [B, Np] f32."""
    B, H = pooled.shape
    Np = w_fold.shape[1]

    full = lambda shape: pl.BlockSpec(shape, lambda: (0,) * len(shape))
    flops = 2 * B * H * Np
    bytes_accessed = (pooled.size * 4 + w_fold.size * 2
                      + b_fold.size * 4 + B * Np * 4)

    return pl.pallas_call(
        bertseq_head_kernel,
        out_shape=jax.ShapeDtypeStruct((B, Np), jnp.float32),
        in_specs=[full(pooled.shape), full(w_fold.shape), full(b_fold.shape)],
        out_specs=full((B, Np)),
        cost_estimate=pl.CostEstimate(
            flops=flops, transcendentals=0, bytes_accessed=bytes_accessed),
    )(pooled, w_fold, b_fold)


# --------------------------- parameter creation ----------------------------- #
def init_params(key, vocab, bert_hidden, embed_dim, class_num):
    """Deterministic synthetic parameters (shapes follow the module's __init__)."""
    ks = jax.random.split(key, 8)
    e2, e4 = embed_dim // 2, embed_dim // 4

    def lin(k, fan_in, fan_out):
        bound = 1.0 / jnp.sqrt(fan_in)
        kw, kb = jax.random.split(k)
        w = jax.random.uniform(kw, (fan_in, fan_out), jnp.float32, -bound, bound)
        b = jax.random.uniform(kb, (1, fan_out), jnp.float32, -bound, bound)
        return w, b

    # BERT stand-in params (embedding + classifier dense to embed_dim "logits")
    tok_emb = jax.random.normal(ks[0], (vocab, bert_hidden), jnp.float32) * 0.02
    w_cls, b_cls = lin(ks[1], bert_hidden, embed_dim)

    # The module's own FC head
    w1, b1 = lin(ks[2], embed_dim, e2)
    w2, b2 = lin(ks[3], e2, e4)
    w3, b3 = lin(ks[4], e4, class_num)
    return dict(tok_emb=tok_emb, w_cls=w_cls, b_cls=b_cls,
                w1=w1, b1=b1, w2=w2, b2=b2, w3=w3, b3=b3)


def fold_head_params(params):
    """Fold classifier + fc1 + fc2 + fc3 (no intervening nonlinearity, dropout =
    identity at eval) into a single weight/bias, lane-padded to 128 columns.
    Done once, in f32; the weight is then cast to bf16 for the MXU."""
    w = params["w_cls"] @ params["w1"]
    w = w @ params["w2"]
    w = w @ params["w3"]                                   # [H, C] f32
    b = params["b_cls"] @ params["w1"] + params["b1"]
    b = b @ params["w2"] + params["b2"]
    b = b @ params["w3"] + params["b3"]                    # [1, C] f32

    H, C = w.shape
    Np = _round_up(max(C, LANE), LANE)
    w_pad = jnp.zeros((H, Np), jnp.float32).at[:, :C].set(w)
    b_pad = jnp.zeros((1, Np), jnp.float32).at[:, :C].set(b)
    return w_pad.astype(jnp.bfloat16), b_pad               # bias stays f32


# ------------------------------- full forward ------------------------------- #
@functools.partial(jax.jit, static_argnames=("class_num",))
def bertseq_forward(params, w_fold, b_fold, input_ids, class_num):
    """input_ids: int32 [B, S] token ids -> [B, class_num] head output."""
    # --- BERT stand-in (glue): embedding lookup + mean pool ---
    emb = jnp.take(params["tok_emb"], input_ids, axis=0)   # [B, S, H]
    pooled = jnp.mean(emb, axis=1)                         # [B, H]

    # --- fused Pallas head: one MXU matmul over the folded weights ---
    out_padded = bertseq_head(pooled, w_fold, b_fold)      # [B, 128]
    return out_padded[:, :class_num]                       # lane-pad sliced off


# ------------------------------ reference check ----------------------------- #
def reference_forward(params, input_ids):
    emb = jnp.take(params["tok_emb"], input_ids, axis=0)
    pooled = jnp.mean(emb, axis=1)
    logits = pooled @ params["w_cls"] + params["b_cls"]
    h1 = logits @ params["w1"] + params["b1"]
    h2 = h1 @ params["w2"] + params["b2"]
    return h2 @ params["w3"] + params["b3"]


if __name__ == "__main__":
    # Small, BERT-consistent synthetic shapes.
    BATCH = 8
    SEQ = 16
    VOCAB = 128
    BERT_HIDDEN = 32
    EMBED_DIM = 256       # stands in for BERT's 768-d hidden / num_labels
    CLASS_NUM = 4

    key = jax.random.PRNGKey(0)
    k_param, k_ids = jax.random.split(key)
    params = init_params(k_param, VOCAB, BERT_HIDDEN, EMBED_DIM, CLASS_NUM)
    w_fold, b_fold = fold_head_params(params)   # one-time fold, outside hot path
    input_ids = jax.random.randint(k_ids, (BATCH, SEQ), 0, VOCAB, dtype=jnp.int32)

    out = bertseq_forward(params, w_fold, b_fold, input_ids, class_num=CLASS_NUM)
    out = jax.block_until_ready(out)

    ref = reference_forward(params, input_ids)
    assert out.shape == (BATCH, CLASS_NUM), out.shape
    # bf16 weights in the kernel -> tolerance sized for bf16 mantissa; the
    # dominant (bias) path stays exact f32, so the error is actually ~1e-5.
    max_err = jnp.max(jnp.abs(out - ref))
    assert jnp.allclose(out, ref, atol=2e-3, rtol=2e-3), f"mismatch: {max_err}"

    print("KERNEL_OK")
</pallas_src>

<mosaic_0001>
module attributes {stable_mosaic.version = 11 : i64} {
  func.func @bertseq_head_kernel(%arg0: memref<8x32xf32, #tpu.memory_space<vmem>>, %arg1: memref<32x128xbf16, #tpu.memory_space<vmem>>, %arg2: memref<1x128xf32, #tpu.memory_space<vmem>>, %arg3: memref<8x128xf32, #tpu.memory_space<vmem>>) attributes {dimension_semantics = [], scalar_prefetch = 0 : i64, scratch_operands = 0 : i64, tpu.core_type = #tpu.core_type<tc>} {
    %c0 = arith.constant 0 : index
    %c0_0 = arith.constant 0 : index
    %0 = vector.load %arg0[%c0, %c0_0] : memref<8x32xf32, #tpu.memory_space<vmem>>, vector<8x32xf32>
    %1 = arith.truncf %0 : vector<8x32xf32> to vector<8x32xbf16>
    %c0_1 = arith.constant 0 : index
    %c0_2 = arith.constant 0 : index
    %2 = vector.load %arg1[%c0_1, %c0_2] : memref<32x128xbf16, #tpu.memory_space<vmem>>, vector<32x128xbf16>
    %cst = arith.constant dense<0.000000e+00> : vector<8x128xf32>
    %3 = tpu.matmul %1, %2, %cst {dimension_numbers = #tpu.dot_dimension_numbers<[1], [0], [0], [1], [0, 0, 1, 1], [], []>} : vector<8x32xbf16>, vector<32x128xbf16>, vector<8x128xf32> -> vector<8x128xf32>
    %c0_3 = arith.constant 0 : index
    %c0_4 = arith.constant 0 : index
    %4 = vector.load %arg2[%c0_3, %c0_4] : memref<1x128xf32, #tpu.memory_space<vmem>>, vector<1x128xf32>
    %5 = vector.broadcast %4 : vector<1x128xf32> to vector<8x128xf32>
    %6 = arith.addf %3, %5 : vector<8x128xf32>
    %c0_5 = arith.constant 0 : index
    %c0_6 = arith.constant 0 : index
    %7 = vector.load %arg3[%c0_5, %c0_6] : memref<8x128xf32, #tpu.memory_space<vmem>>, vector<8x128xf32>
    tpu.vector_store %arg3[%c0_5, %c0_6], %6 {strides = array<i32>} : memref<8x128xf32, #tpu.memory_space<vmem>>, vector<8x128xf32>,
    return
  }
}

</mosaic_0001>

<llo_original>
// kernel: bertseq_forward.1
$region0: #{bertseq_forward.1}
  #allocation0 [shape = 'u32[]', space=smem, size = 0x4, offset = 0x4, fixed_abs, tag = 'smem constant byte address 0x4 - core index']
  #allocation1 [shape = 'u32[144,128]{1,0:T(1,128)}', space=vmem, size = 0x12000, scoped, tag = 'internal scratch']
  %s0 = inlined_call_operand.vmem [shape: f32[8,32], index: 0, kind: input, shape index: {}]
  %s1 = inlined_call_operand.vmem [shape: bf16[32,128], index: 1, kind: input, shape index: {}]
  %s2 = inlined_call_operand.vmem [shape: f32[1,128], index: 2, kind: input, shape index: {}]
  %s3 = inlined_call_operand.vmem [shape: f32[8,128], index: 3, kind: output, shape index: {}]
  %s4 = sld [smem:[#allocation0]]
  $region22: #{bertseq_forward.1} parent=0
    _
  %s6 = ssub.s32 1, %s4
  %s7 = scalar_select 0, %s6, %s4
  // Predicated region
  $region2: #{bertseq_forward.1} parent=0 // pred_check
    _
  $region3: #{bertseq_forward.1} parent=0 // pred_check_branch
    %9 = sbr.rel (0) target = $region5
  $region4: #{bertseq_forward.1} parent=0 // pred_region
    _
  $region5: #{bertseq_forward.1} parent=0 // pred_fallthru
    _
  // Predicated region
  $region6: #{bertseq_forward.1} parent=0 // pred_check
    _
  $region7: #{bertseq_forward.1} parent=0 // pred_check_branch
    %11 = sbr.rel (0) target = $region9
  $region8: #{bertseq_forward.1} parent=0 // pred_region
    _
  $region9: #{bertseq_forward.1} parent=0 // pred_fallthru
    _
  // Predicated region
  $region10: #{bertseq_forward.1} parent=0 // pred_check
    _
  $region11: #{bertseq_forward.1} parent=0 // pred_check_branch
    %13 = sbr.rel (0) target = $region13
  $region12: #{bertseq_forward.1} parent=0 // pred_region
    _
  $region13: #{bertseq_forward.1} parent=0 // pred_fallthru
    _
  %v15 = vld [vmem:[%s0] sm:$0xff]
  %v16 = vpack.c.bf16 %v15, %v15
  %v17 = vld [vmem:[%s1] sm:$0xf]
  %v18 = vld [vmem:[%s1 + $0x4] sm:$0xf]
  %v19 = vld [vmem:[%s1 + $0x8] sm:$0xf]
  %v20 = vld [vmem:[%s1 + $0xc] sm:$0xf]
  %v21 = vld [vmem:[%s2] sm:$0x1]
  %v23 = vlaneseq
  %v24 = vshrl.u32 %v23, 7
  %v25 = vsub.s32 0, %v24
  %v26 = vrot.slane %v21, %v25
  %v32 = vunpack.c.l.b16 %v17
  %v33 = vunpack.c.l.b16 %v18
  %v34 = vunpack.c.l.b16 %v19
  %v35 = vunpack.c.l.b16 %v20
  %v36 = vpack.c.b16 %v33, %v32
  %v37 = vpack.c.b16 %v35, %v34
  %vm40 = vcmask 261120
  %v42 = vsel %vm40, %v16, 0
  %44 = vmatprep.subr.bf16.mxu0 0
  %45 = vmatpush1.bf16.msra.mxu0 %v36
  %46 = vmatprep.subr.bf16.mxu0 0
  %47 = vmatpush1.bf16.msra.mxu0 %v37
  %48 = vmatprep.subr.bf16.mxu0 0
  %49 = vmatpush1.bf16.msra.mxu0 0
  %50 = vmatprep.subr.bf16.mxu0 0
  %51 = vmatpush1.bf16.msra.mxu0 0
  %52 = vmatprep.subr.bf16.mxu0 0
  %53 = vmatpush1.bf16.msra.mxu0 0
  %54 = vmatprep.subr.bf16.mxu0 0
  %55 = vmatpush1.bf16.msra.mxu0 0
  %56 = vmatprep.subr.bf16.mxu0 0
  %57 = vmatpush1.bf16.msra.mxu0 0
  %58 = vmatprep.subr.bf16.mxu0 0
  %59 = vmatpush1.bf16.msra.mxu0 0
  %60 = vmatprep.subr.bf16.mxu0 0
  %61 = vmatpush1.bf16.msra.mxu0 0
  %62 = vmatprep.subr.bf16.mxu0 0
  %63 = vmatpush1.bf16.msra.mxu0 0
  %64 = vmatprep.subr.bf16.mxu0 0
  %65 = vmatpush1.bf16.msra.mxu0 0
  %66 = vmatprep.subr.bf16.mxu0 0
  %67 = vmatpush1.bf16.msra.mxu0 0
  %68 = vmatprep.subr.bf16.mxu0 0
  %69 = vmatpush1.bf16.msra.mxu0 0
  %70 = vmatprep.subr.bf16.mxu0 0
  %71 = vmatpush1.bf16.msra.mxu0 0
  %72 = vmatprep.subr.bf16.mxu0 0
  %73 = vmatpush1.bf16.msra.mxu0 0
  %74 = vmatprep.subr.bf16.mxu0 0
  %75 = vmatpush1.bf16.msra.mxu0 0
  %76 = vmatprep.mubr.bf16.mxu0 0
  %77 = vmatmul.mubr.bf16.gmra.mrb[0].mxu0 %v42
  %v78 = vpop.f32.mrb[0].mxu0
  %v79 = vadd.f32 %v26, %v78
  %v80 = vpop.f32.mrb[0].mxu0
  %v81 = vpop.f32.mrb[0].mxu0
  %v82 = vpop.f32.mrb[0].mxu0
  %83 = vdwg.mxu0
  %84 = vst [vmem:[%s3] sm:$0xff] %v79
  // Predicated region
  $region14: #{bertseq_forward.1} parent=0 // pred_check
    _
  $region15: #{bertseq_forward.1} parent=0 // pred_check_branch
    %86 = sbr.rel (0) target = $region17
  $region16: #{bertseq_forward.1} parent=0 // pred_region
    _
  $region17: #{bertseq_forward.1} parent=0 // pred_fallthru
    _
  // Predicated region
  $region18: #{bertseq_forward.1} parent=0 // pred_check
    _
  $region19: #{bertseq_forward.1} parent=0 // pred_check_branch
    %88 = sbr.rel (0) target = $region21
  $region20: #{bertseq_forward.1} parent=0 // pred_region
    _
  $region21: #{bertseq_forward.1} parent=0 // pred_fallthru
    _

</llo_original>
